<compile_context>
chip_gen: v7x
topology: tpu7x:2x2x1
jax: 0.10.0
libtpu: 0.0.40
codegen_flags: <defaults>
</compile_context>

<pallas_src>
import functools

import jax
import jax.numpy as jnp
from jax.experimental import pallas as pl
from jax.experimental.pallas import tpu as pltpu


def _conti_embed_kernel(x_ref, w_ref, b_ref, o_ref):
    # x_ref: (TN, TC)   w_ref / b_ref: (1, TC*D) lane-dense   o_ref: (TN, TC*D)
    x = x_ref[...]
    w = w_ref[...]
    b = b_ref[...]
    tn, tc = x.shape
    d = w.shape[1] // tc
    # Compute straight into the lane-dense output block: one (TN, D) VPU
    # broadcast-FMA per feature, stored at its static lane offset. No lane-
    # padded (TN, TC, D) intermediate and no relayout before the store.
    for c in range(tc):
        lo, hi = c * d, (c + 1) * d
        o_ref[:, lo:hi] = (
            x[:, c : c + 1] * w[:, lo:hi] + b[:, lo:hi]
        ).astype(o_ref.dtype)


@functools.lru_cache(maxsize=None)
def _vmem_config():
    """Return (budget_bytes, vmem_limit_bytes) chosen per TPU generation."""
    try:
        cap = int(getattr(pltpu.get_tpu_info(), "vmem_capacity_bytes", 0))
    except Exception:  # non-TPU trace / API drift: conservative fallback.
        cap = 0
    if cap and cap <= 64 * 1024 * 1024:
        # v7x-class: 64 MiB physical VMEM -> keep scoped usage well inside it.
        return 20 * 1024 * 1024, 32 * 1024 * 1024
    if cap >= 128 * 1024 * 1024:
        # v5e / v6e: 128 MiB physical -> take big row tiles (85%+ roofline).
        return 32 * 1024 * 1024, 64 * 1024 * 1024
    # Unknown hardware: safe everywhere.
    return 16 * 1024 * 1024, 32 * 1024 * 1024


def _pick_tiles(N, C, D, out_itemsize, row_align, vmem_budget_bytes):
    """Static (trace-time) tile selection. All inputs are Python ints."""

    def per_row_bytes(tile_c):
        # x block: lanes padded to 128, f32, double-buffered.
        x_bytes = 2 * (-(-tile_c // 128)) * 128 * 4
        # Lane-dense output block, double-buffered.
        o_bytes = 2 * tile_c * D * out_itemsize
        return x_bytes + o_bytes

    def fixed_bytes(tile_c):
        # Resident flattened W / bias blocks: 2 arrays x 2 buffers, sublane
        # dim padded 1 -> 8, f32.
        return 2 * 2 * 8 * tile_c * D * 4

    # Chunk the feature axis only when even a minimal row tile busts the
    # budget AND a 128-lane-legal divisor of C exists (keeps the x block's
    # last dim and the flattened W/out blocks (8,128)-legal).
    tile_c = C
    if (fixed_bytes(C) + row_align * per_row_bytes(C) > vmem_budget_bytes
            and C % 128 == 0):
        cand = C - 128
        chosen = 128
        while cand >= 128:
            if (C % cand == 0
                    and fixed_bytes(cand) + row_align * per_row_bytes(cand)
                    <= vmem_budget_bytes):
                chosen = cand
                break
            cand -= 128
        tile_c = chosen
    # TODO(synk): when C % 128 != 0 and C*D is huge there is no legal feature
    # chunking; the kernel then relies on vmem_limit_bytes headroom.

    avail = max(vmem_budget_bytes - fixed_bytes(tile_c),
                row_align * per_row_bytes(tile_c))
    tile_n = (avail // per_row_bytes(tile_c)) // row_align * row_align
    tile_n = max(row_align, tile_n)
    # Never bigger than the (row-aligned) problem.
    tile_n = min(tile_n, -(-N // row_align) * row_align)
    # Keep >= 2 row tiles whenever possible so both v7x TensorCores get work.
    ceil_half = -(-N // 2)
    half_tile = -(-ceil_half // row_align) * row_align
    if half_tile < N:
        tile_n = min(tile_n, half_tile)
    return max(row_align, tile_n), tile_c


@functools.partial(jax.jit, static_argnames=("out_dtype",))
def conti_feature_embedding(x, w, b, *, out_dtype=None):
    """x: (B, S, C) f32; w, b: (C, D) f32 -> (B, S, C, D)."""
    B, S, C = x.shape
    C_w, D = w.shape
    assert C == C_w, (C, C_w)
    N = B * S
    CD = C * D

    out_dtype = jnp.dtype(out_dtype) if out_dtype is not None else x.dtype
    row_align = 16 if out_dtype.itemsize == 2 else 8

    budget, limit = _vmem_config()
    tile_n, tile_c = _pick_tiles(N, C, D, out_dtype.itemsize, row_align, budget)

    # No padding: cdiv grid + Pallas masking handles a ragged last row block,
    # so there is no extra out[:N] HBM pass and no padded-x copy.
    x2 = x.reshape(N, C)
    w_flat = w.reshape(1, CD)
    b_flat = b.reshape(1, CD)

    grid = (pl.cdiv(N, tile_n), C // tile_c)

    out_flat = pl.pallas_call(
        _conti_embed_kernel,
        out_shape=jax.ShapeDtypeStruct((N, CD), out_dtype),
        grid_spec=pltpu.PrefetchScalarGridSpec(
            num_scalar_prefetch=0,
            grid=grid,
            in_specs=[
                # x rows: tiled along both grid axes.
                pl.BlockSpec((tile_n, tile_c), lambda i, j: (i, j)),
                # Flattened W / bias: constant across the row axis -> resident.
                pl.BlockSpec((1, tile_c * D), lambda i, j: (0, j)),
                pl.BlockSpec((1, tile_c * D), lambda i, j: (0, j)),
            ],
            # Lane-dense flattened output block.
            out_specs=pl.BlockSpec((tile_n, tile_c * D), lambda i, j: (i, j)),
        ),
        compiler_params=pltpu.CompilerParams(
            # Independent output tiles on both axes -> shard across TCs.
            dimension_semantics=("parallel", "parallel"),
            vmem_limit_bytes=limit,
        ),
    )(x2, w_flat, b_flat)

    return out_flat.reshape(B, S, C, D)


def init_params(key, conti_num, d_embed):
    """Deterministic init matching nn.Linear(1, d_embed) param shapes.

    Each Linear has weight (d_embed, 1) and bias (d_embed,); with fan_in = 1
    PyTorch draws both uniformly from (-1, 1). Packed here as
    W: (conti_num, d_embed), b: (conti_num, d_embed).
    """
    kw, kb = jax.random.split(key)
    w = jax.random.uniform(kw, (conti_num, d_embed), jnp.float32, -1.0, 1.0)
    b = jax.random.uniform(kb, (conti_num, d_embed), jnp.float32, -1.0, 1.0)
    return w, b


if __name__ == "__main__":
    B, S, CONTI_NUM, D_EMBED = 2, 8, 4, 32

    key = jax.random.PRNGKey(0)
    kx, kp = jax.random.split(key)

    x = jax.random.normal(kx, (B, S, CONTI_NUM), dtype=jnp.float32)
    w, b = init_params(kp, CONTI_NUM, D_EMBED)

    out = conti_feature_embedding(x, w, b)
    out = jax.block_until_ready(out)

    # Pure-JAX reference for correctness.
    ref = x[:, :, :, None] * w[None, None, :, :] + b[None, None, :, :]
    assert out.shape == (B, S, CONTI_NUM, D_EMBED), out.shape
    assert out.dtype == jnp.float32, out.dtype
    assert jnp.allclose(out, ref, atol=1e-6, rtol=1e-6), "mismatch vs reference"

    print("KERNEL_OK")
</pallas_src>

<mosaic_0001>
module attributes {stable_mosaic.version = 11 : i64} {
  func.func @_conti_embed_kernel(%arg0: i32, %arg1: i32, %arg2: memref<8x4xf32, #tpu.memory_space<vmem>>, %arg3: memref<1x128xf32, #tpu.memory_space<vmem>>, %arg4: memref<1x128xf32, #tpu.memory_space<vmem>>, %arg5: memref<8x128xf32, #tpu.memory_space<vmem>>) attributes {dimension_semantics = [#tpu.dimension_semantics<parallel>, #tpu.dimension_semantics<parallel>], iteration_bounds = array<i64: 2, 1>, scalar_prefetch = 0 : i64, scratch_operands = 0 : i64, tpu.core_type = #tpu.core_type<tc>, window_params = [{transform_indices = @transform_0, window_bounds = array<i64: 8, 4>}, {transform_indices = @transform_1, window_bounds = array<i64: 1, 128>}, {transform_indices = @transform_2, window_bounds = array<i64: 1, 128>}, {transform_indices = @transform_3, window_bounds = array<i64: 8, 128>}]} {
    %c0 = arith.constant 0 : index
    %c0_0 = arith.constant 0 : index
    %0 = vector.load %arg2[%c0, %c0_0] : memref<8x4xf32, #tpu.memory_space<vmem>>, vector<8x4xf32>
    %c0_1 = arith.constant 0 : index
    %c0_2 = arith.constant 0 : index
    %1 = vector.load %arg3[%c0_1, %c0_2] : memref<1x128xf32, #tpu.memory_space<vmem>>, vector<1x128xf32>
    %c0_3 = arith.constant 0 : index
    %c0_4 = arith.constant 0 : index
    %2 = vector.load %arg4[%c0_3, %c0_4] : memref<1x128xf32, #tpu.memory_space<vmem>>, vector<1x128xf32>
    %3 = vector.extract_strided_slice %0 {offsets = [0, 0], sizes = [8, 1], strides = [1, 1]} : vector<8x4xf32> to vector<8x1xf32>
    %4 = vector.extract_strided_slice %1 {offsets = [0, 0], sizes = [1, 32], strides = [1, 1]} : vector<1x128xf32> to vector<1x32xf32>
    %5 = vector.broadcast %3 : vector<8x1xf32> to vector<8x32xf32>
    %6 = vector.broadcast %4 : vector<1x32xf32> to vector<8x32xf32>
    %7 = arith.mulf %5, %6 : vector<8x32xf32>
    %8 = vector.extract_strided_slice %2 {offsets = [0, 0], sizes = [1, 32], strides = [1, 1]} : vector<1x128xf32> to vector<1x32xf32>
    %9 = vector.broadcast %8 : vector<1x32xf32> to vector<8x32xf32>
    %10 = arith.addf %7, %9 : vector<8x32xf32>
    %c0_5 = arith.constant 0 : index
    %c0_6 = arith.constant 0 : index
    %11 = vector.load %arg5[%c0_5, %c0_6] : memref<8x128xf32, #tpu.memory_space<vmem>>, vector<8x32xf32>
    tpu.vector_store %arg5[%c0_5, %c0_6], %10 {strides = array<i32>} : memref<8x128xf32, #tpu.memory_space<vmem>>, vector<8x32xf32>,
    %12 = vector.extract_strided_slice %0 {offsets = [0, 1], sizes = [8, 1], strides = [1, 1]} : vector<8x4xf32> to vector<8x1xf32>
    %13 = vector.extract_strided_slice %1 {offsets = [0, 32], sizes = [1, 32], strides = [1, 1]} : vector<1x128xf32> to vector<1x32xf32>
    %14 = vector.broadcast %12 : vector<8x1xf32> to vector<8x32xf32>
    %15 = vector.broadcast %13 : vector<1x32xf32> to vector<8x32xf32>
    %16 = arith.mulf %14, %15 : vector<8x32xf32>
    %17 = vector.extract_strided_slice %2 {offsets = [0, 32], sizes = [1, 32], strides = [1, 1]} : vector<1x128xf32> to vector<1x32xf32>
    %18 = vector.broadcast %17 : vector<1x32xf32> to vector<8x32xf32>
    %19 = arith.addf %16, %18 : vector<8x32xf32>
    %c0_7 = arith.constant 0 : index
    %c32 = arith.constant 32 : index
    %20 = vector.load %arg5[%c0_7, %c32] : memref<8x128xf32, #tpu.memory_space<vmem>>, vector<8x32xf32>
    tpu.vector_store %arg5[%c0_7, %c32], %19 {strides = array<i32>} : memref<8x128xf32, #tpu.memory_space<vmem>>, vector<8x32xf32>,
    %21 = vector.extract_strided_slice %0 {offsets = [0, 2], sizes = [8, 1], strides = [1, 1]} : vector<8x4xf32> to vector<8x1xf32>
    %22 = vector.extract_strided_slice %1 {offsets = [0, 64], sizes = [1, 32], strides = [1, 1]} : vector<1x128xf32> to vector<1x32xf32>
    %23 = vector.broadcast %21 : vector<8x1xf32> to vector<8x32xf32>
    %24 = vector.broadcast %22 : vector<1x32xf32> to vector<8x32xf32>
    %25 = arith.mulf %23, %24 : vector<8x32xf32>
    %26 = vector.extract_strided_slice %2 {offsets = [0, 64], sizes = [1, 32], strides = [1, 1]} : vector<1x128xf32> to vector<1x32xf32>
    %27 = vector.broadcast %26 : vector<1x32xf32> to vector<8x32xf32>
    %28 = arith.addf %25, %27 : vector<8x32xf32>
    %c0_8 = arith.constant 0 : index
    %c64 = arith.constant 64 : index
    %29 = vector.load %arg5[%c0_8, %c64] : memref<8x128xf32, #tpu.memory_space<vmem>>, vector<8x32xf32>
    tpu.vector_store %arg5[%c0_8, %c64], %28 {strides = array<i32>} : memref<8x128xf32, #tpu.memory_space<vmem>>, vector<8x32xf32>,
    %30 = vector.extract_strided_slice %0 {offsets = [0, 3], sizes = [8, 1], strides = [1, 1]} : vector<8x4xf32> to vector<8x1xf32>
    %31 = vector.extract_strided_slice %1 {offsets = [0, 96], sizes = [1, 32], strides = [1, 1]} : vector<1x128xf32> to vector<1x32xf32>
    %32 = vector.broadcast %30 : vector<8x1xf32> to vector<8x32xf32>
    %33 = vector.broadcast %31 : vector<1x32xf32> to vector<8x32xf32>
    %34 = arith.mulf %32, %33 : vector<8x32xf32>
    %35 = vector.extract_strided_slice %2 {offsets = [0, 96], sizes = [1, 32], strides = [1, 1]} : vector<1x128xf32> to vector<1x32xf32>
    %36 = vector.broadcast %35 : vector<1x32xf32> to vector<8x32xf32>
    %37 = arith.addf %34, %36 : vector<8x32xf32>
    %c0_9 = arith.constant 0 : index
    %c96 = arith.constant 96 : index
    %38 = vector.load %arg5[%c0_9, %c96] : memref<8x128xf32, #tpu.memory_space<vmem>>, vector<8x32xf32>
    tpu.vector_store %arg5[%c0_9, %c96], %37 {strides = array<i32>} : memref<8x128xf32, #tpu.memory_space<vmem>>, vector<8x32xf32>,
    return
  }
  func.func @transform_0(%arg0: i32, %arg1: i32) -> (i32, i32) {
    %c0_i32 = arith.constant 0 : i32
    return %arg0, %arg1 : i32, i32
  }
  func.func @transform_1(%arg0: i32, %arg1: i32) -> (i32, i32) {
    %c0_i32 = arith.constant 0 : i32
    %c0_i32_0 = arith.constant 0 : i32
    return %c0_i32, %arg1 : i32, i32
  }
  func.func @transform_2(%arg0: i32, %arg1: i32) -> (i32, i32) {
    %c0_i32 = arith.constant 0 : i32
    %c0_i32_0 = arith.constant 0 : i32
    return %c0_i32, %arg1 : i32, i32
  }
  func.func @transform_3(%arg0: i32, %arg1: i32) -> (i32, i32) {
    %c0_i32 = arith.constant 0 : i32
    return %arg0, %arg1 : i32, i32
  }
}

</mosaic_0001>

<llo_original>
// kernel: conti_feature_embedding.1
$region0: #{conti_feature_embedding.1}
  #allocation0 [shape = 'u32[]', space=smem, size = 0x4, offset = 0x4, fixed_abs, tag = 'smem constant byte address 0x4 - core index']
  #allocation1 [shape = 'u32[144,128]{1,0:T(1,128)}', space=vmem, size = 0x12000, scoped, tag = 'internal scratch']
  %s0 = inlined_call_operand.vmem [shape: f32[16,4], index: 0, kind: input, shape index: {}]
  %s1 = inlined_call_operand.vmem [shape: f32[1,128], index: 1, kind: input, shape index: {}]
  %s2 = inlined_call_operand.vmem [shape: f32[1,128], index: 2, kind: input, shape index: {}]
  %s3 = inlined_call_operand.vmem [shape: f32[16,128], index: 3, kind: output, shape index: {}]
  %s4 = sld [smem:[#allocation0]]
  $region45: #{conti_feature_embedding.1} parent=0
    _
  %s6 = ssub.s32 1, %s4
  %s7 = scalar_select 0, %s6, %s4
  loop: start=0, step=1, limit=4
  $region2: #{conti_feature_embedding.1} parent=0 // loop_pre_header
    _
  $region3: #{conti_feature_embedding.1} parent=0 // loop_header
    %s9 = sphi 0, %s13
    %p10 = scmp.ge.s32.totalorder %s9, 4
    %s16 = sphi 0, %s28
    %s17 = sphi 0, %s24
    %s18 = sphi 0, %s16
    %s19 = sphi 0, %s17
    %s20 = sphi 0, %s18
    %s21 = sphi 0, %s19
    %s33 = sphi 0, %s35
    %s36 = sphi 0, %s33
    %s37 = sphi 0, %s36
    %s53 = sphi 0, %s37
    %s59 = sphi 0, %s61
    %s62 = sphi 0, %s59
    %s63 = sphi 0, %s62
    %s79 = sphi 0, %s63
    %s85 = sphi 0, %s87
    %s88 = sphi 0, %s85
    %s89 = sphi 0, %s88
    %s105 = sphi 0, %s89
    %s113 = sphi 0, %s115
    %s116 = sphi 0, %s113
    %s117 = sphi 0, %s116
    %s133 = sphi 0, %s117
  $region4: #{conti_feature_embedding.1} parent=0 // loop_header_branch
    %12 = sbr.rel (%p10) target = $region8
  $region5: #{conti_feature_embedding.1} parent=0 // loop_body
    %s14 = ssub.s32 %s9, 1
    %s15 = ssub.s32 %s9, 2
    %s22 = sadd.s32 1, %s17
    %p23 = scmp.ge.s32.totalorder %s22, 1
    %s24 = scalar_select %p23, 0, %s22
    %s25 = sadd.s32 1, %s16
    %s26 = scalar_select %p23, %s25, %s16
    %p27 = scmp.ge.s32.totalorder %s26, 2
    %s28 = scalar_select %p27, 0, %s26
    %s29 = ssub.s32 %s16, %s28
    %s30 = ssub.s32 %s17, %s24
    %s31 = sor.u32 %s29, %s30
    %p32 = scmp.eq.s32.totalorder %s31, 0
    %s34 = sadd.s32 %s33, 1
    %s35 = scalar_select %p32, %s33, %s34
    %p38 = pneg %p32
    %p39 = scmp.eq.s32.totalorder %s9, 1
    %p40 = por %p38, %p39
    %p41 = scmp.ne.s32.totalorder %s33, %s36
    %p42 = scmp.eq.s32.totalorder %s9, 0
    %p43 = por %p41, %p42
    %p44 = scmp.ne.s32.totalorder %s33, %s36
    %p45 = scmp.eq.s32.totalorder %s14, 1
    %p46 = por %p44, %p45
    %p47 = scmp.ne.s32.totalorder %s36, %s37
    %p48 = scmp.eq.s32.totalorder %s14, 0
    %p49 = por %p47, %p48
    %p50 = scmp.ne.s32.totalorder %s36, %s37
    %p51 = scmp.eq.s32.totalorder %s15, 1
    %p52 = por %p50, %p51
    %p54 = scmp.ne.s32.totalorder %s37, %s53
    %p55 = scmp.eq.s32.totalorder %s15, 0
    %p56 = por %p54, %p55
    %s57 = ssub.s32 %s17, %s24
    %p58 = scmp.eq.s32.totalorder %s57, 0
    %s60 = sadd.s32 %s59, 1
    %s61 = scalar_select %p58, %s59, %s60
    %p64 = pneg %p58
    %p65 = scmp.eq.s32.totalorder %s9, 1
    %p66 = por %p64, %p65
    %p67 = scmp.ne.s32.totalorder %s59, %s62
    %p68 = scmp.eq.s32.totalorder %s9, 0
    %p69 = por %p67, %p68
    %p70 = scmp.ne.s32.totalorder %s59, %s62
    %p71 = scmp.eq.s32.totalorder %s14, 1
    %p72 = por %p70, %p71
    %p73 = scmp.ne.s32.totalorder %s62, %s63
    %p74 = scmp.eq.s32.totalorder %s14, 0
    %p75 = por %p73, %p74
    %p76 = scmp.ne.s32.totalorder %s62, %s63
    %p77 = scmp.eq.s32.totalorder %s15, 1
    %p78 = por %p76, %p77
    %p80 = scmp.ne.s32.totalorder %s63, %s79
    %p81 = scmp.eq.s32.totalorder %s15, 0
    %p82 = por %p80, %p81
    %s83 = ssub.s32 %s17, %s24
    %p84 = scmp.eq.s32.totalorder %s83, 0
    %s86 = sadd.s32 %s85, 1
    %s87 = scalar_select %p84, %s85, %s86
    %p90 = pneg %p84
    %p91 = scmp.eq.s32.totalorder %s9, 1
    %p92 = por %p90, %p91
    %p93 = scmp.ne.s32.totalorder %s85, %s88
    %p94 = scmp.eq.s32.totalorder %s9, 0
    %p95 = por %p93, %p94
    %p96 = scmp.ne.s32.totalorder %s85, %s88
    %p97 = scmp.eq.s32.totalorder %s14, 1
    %p98 = por %p96, %p97
    %p99 = scmp.ne.s32.totalorder %s88, %s89
    %p100 = scmp.eq.s32.totalorder %s14, 0
    %p101 = por %p99, %p100
    %p102 = scmp.ne.s32.totalorder %s88, %s89
    %p103 = scmp.eq.s32.totalorder %s15, 1
    %p104 = por %p102, %p103
    %p106 = scmp.ne.s32.totalorder %s89, %s105
    %p107 = scmp.eq.s32.totalorder %s15, 0
    %p108 = por %p106, %p107
    %s109 = ssub.s32 %s16, %s28
    %s110 = ssub.s32 %s17, %s24
    %s111 = sor.u32 %s109, %s110
    %p112 = scmp.eq.s32.totalorder %s111, 0
    %s114 = sadd.s32 %s113, 1
    %s115 = scalar_select %p112, %s113, %s114
    %p118 = pneg %p112
    %p119 = scmp.eq.s32.totalorder %s9, 1
    %p120 = por %p118, %p119
    %p121 = scmp.ne.s32.totalorder %s113, %s116
    %p122 = scmp.eq.s32.totalorder %s9, 0
    %p123 = por %p121, %p122
    %p124 = scmp.ne.s32.totalorder %s113, %s116
    %p125 = scmp.eq.s32.totalorder %s14, 1
    %p126 = por %p124, %p125
    %p127 = scmp.ne.s32.totalorder %s116, %s117
    %p128 = scmp.eq.s32.totalorder %s14, 0
    %p129 = por %p127, %p128
    %p130 = scmp.ne.s32.totalorder %s116, %s117
    %p131 = scmp.eq.s32.totalorder %s15, 1
    %p132 = por %p130, %p131
    %p134 = scmp.ne.s32.totalorder %s117, %s133
    %p135 = scmp.eq.s32.totalorder %s15, 0
    %p136 = por %p134, %p135
    %p137 = scmp.le.s32.totalorder 1, %s9
    %p138 = scmp.lt.s32.totalorder %s9, 3
    %p139 = pnand %p137, %p138
    %p140 = pneg %p139
    // Predicated region
    $region9: #{conti_feature_embedding.1} parent=5 // pred_check
      _
    $region10: #{conti_feature_embedding.1} parent=5 // pred_check_branch
      %142 = sbr.rel (%p139) target = $region12
    $region11: #{conti_feature_embedding.1} parent=5 // pred_region
      %s143 = ssub.s32 %s9, 1
      // Predicated region
      $region13: #{conti_feature_embedding.1} parent=11 // pred_check
        %p144 = pneg %p75
      $region14: #{conti_feature_embedding.1} parent=11 // pred_check_branch
        %146 = sbr.rel (%p144) target = $region16
      $region15: #{conti_feature_embedding.1} parent=11 // pred_region
        %p147 = scmp.lt.s32.totalorder %s19, 0
        %s148 = scalar_select %p147, %s19, 0
        %s149 = scalar_lea.vmem %s1, %s148
      $region16: #{conti_feature_embedding.1} parent=11 // pred_fallthru
        _
      // Predicated region
      $region17: #{conti_feature_embedding.1} parent=11 // pred_check
        %p150 = pneg %p101
      $region18: #{conti_feature_embedding.1} parent=11 // pred_check_branch
        %152 = sbr.rel (%p150) target = $region20
      $region19: #{conti_feature_embedding.1} parent=11 // pred_region
        %p153 = scmp.lt.s32.totalorder %s19, 0
        %s154 = scalar_select %p153, %s19, 0
        %s155 = scalar_lea.vmem %s2, %s154
      $region20: #{conti_feature_embedding.1} parent=11 // pred_fallthru
        _
    $region12: #{conti_feature_embedding.1} parent=5 // pred_fallthru
      _
    %p156 = scmp.lt.s32.totalorder %s9, 2
    // Predicated region
    $region21: #{conti_feature_embedding.1} parent=5 // pred_check
      %p157 = pneg %p156
    $region22: #{conti_feature_embedding.1} parent=5 // pred_check_branch
      %159 = sbr.rel (%p157) target = $region24
    $region23: #{conti_feature_embedding.1} parent=5 // pred_region
      // Predicated region
      $region25: #{conti_feature_embedding.1} parent=23 // pred_check
        %p160 = pneg %p43
      $region26: #{conti_feature_embedding.1} parent=23 // pred_check_branch
        %162 = sbr.rel (%p160) target = $region28
      $region27: #{conti_feature_embedding.1} parent=23 // pred_region
        %p163 = scmp.lt.s32.totalorder %s16, 1
        %s164 = scalar_select %p163, %s16, 1
        %p165 = scmp.lt.s32.totalorder %s17, 0
        %s166 = scalar_select %p165, %s17, 0
        %s167 = sadd.s32 %s166, %s164
        %s168 = smul.addr %s167, 8
        %s169 = scalar_lea.vmem %s0, %s168
      $region28: #{conti_feature_embedding.1} parent=23 // pred_fallthru
        _
    $region24: #{conti_feature_embedding.1} parent=5 // pred_fallthru
      _
    %p170 = scmp.le.s32.totalorder 1, %s9
    %p171 = scmp.lt.s32.totalorder %s9, 3
    %p172 = pnand %p170, %p171
    %p173 = pneg %p172
    // Predicated region
    $region29: #{conti_feature_embedding.1} parent=5 // pred_check
      _
    $region30: #{conti_feature_embedding.1} parent=5 // pred_check_branch
      %175 = sbr.rel (%p172) target = $region32
    $region31: #{conti_feature_embedding.1} parent=5 // pred_region
      %s176 = ssub.s32 %s9, 1
      %p177 = scmp.lt.s32.totalorder %s18, 1
      %s178 = scalar_select %p177, %s18, 1
      %p179 = scmp.lt.s32.totalorder %s19, 0
      %s180 = scalar_select %p179, %s19, 0
      %s181 = sadd.s32 %s180, %s178
      %s182 = smul.addr %s181, 8
      %s183 = scalar_lea.vmem %s0, %s182
      %p184 = pneg %p49
      %p185 = pneg %p46
      %p186 = scmp.lt.s32.totalorder %s19, 0
      %s187 = scalar_select %p186, %s19, 0
      %s188 = scalar_lea.vmem %s1, %s187
      %p189 = pneg %p75
      %p190 = pneg %p72
      %p191 = scmp.lt.s32.totalorder %s19, 0
      %s192 = scalar_select %p191, %s19, 0
      %s193 = scalar_lea.vmem %s2, %s192
      %p194 = pneg %p101
      %p195 = pneg %p98
      %p196 = pneg %p129
      %p197 = pneg %p126
      %p198 = scmp.lt.s32.totalorder %s18, 1
      %s199 = scalar_select %p198, %s18, 1
      %p200 = scmp.lt.s32.totalorder %s19, 0
      %s201 = scalar_select %p200, %s19, 0
      %s202 = sadd.s32 %s201, %s199
      %s203 = smul.addr %s202, 8
      %s204 = scalar_lea.vmem %s3, %s203
      %p205 = scmp.lt.s32.totalorder %s18, 1
      %s206 = scalar_select %p205, %s18, 1
      %p207 = scmp.lt.s32.totalorder %s19, 0
      %s208 = scalar_select %p207, %s19, 0
      %s209 = sadd.s32 %s208, %s206
      %s210 = smul.addr %s209, 8
      %s211 = scalar_lea.vmem %s0, %s210
      %p212 = scmp.lt.s32.totalorder %s19, 0
      %s213 = scalar_select %p212, %s19, 0
      %s214 = scalar_lea.vmem %s1, %s213
      %p215 = scmp.lt.s32.totalorder %s19, 0
      %s216 = scalar_select %p215, %s19, 0
      %s217 = scalar_lea.vmem %s2, %s216
      %p218 = scmp.lt.s32.totalorder %s18, 1
      %s219 = scalar_select %p218, %s18, 1
      %p220 = scmp.lt.s32.totalorder %s19, 0
      %s221 = scalar_select %p220, %s19, 0
      %s222 = sadd.s32 %s221, %s219
      %s223 = smul.addr %s222, 8
      %s224 = scalar_lea.vmem %s3, %s223
      %v225 = vld [vmem:[%s211] sm:$0xff]
      %v226 = vld [vmem:[%s214] sm:$0x1]
      %v227 = vld [vmem:[%s217] sm:$0x1]
      %229 = vset.pattern.permute.xlu0 0
      %230 = vperm.xlu0 %229, %v225
      %v231 = vpop.permute.xlu0 %230
      %v234 = vlaneseq
      %v235 = vshrl.u32 %v234, 7
      %v236 = vsub.s32 0, %v235
      %v237 = vrot.slane %v226, %v236
      %v239 = vmul.f32 %v231, %v237
      %v241 = vlaneseq
      %v242 = vshrl.u32 %v241, 7
      %v243 = vsub.s32 0, %v242
      %v244 = vrot.slane %v227, %v243
      %v246 = vadd.f32 %v239, %v244
      %vm247 = vcmask 261120
      %248 = vst.msk [vmem:[%s224] sm:$0xff] %vm247, %v246
      %249 = vset.pattern.permute.xlu0 1
      %250 = vperm.xlu0 %249, %v225
      %v251 = vpop.permute.xlu0 %250
      %v253 = vmul.f32 %v251, %v237
      %v254 = vadd.f32 %v253, %v244
      %vm255 = vcmask 523520
      %256 = vst.msk [vmem:[%s224] sm:$0xff] %vm255, %v254
      %257 = vset.pattern.permute.xlu0 2
      %258 = vperm.xlu0 %257, %v225
      %v259 = vpop.permute.xlu0 %258
      %v261 = vmul.f32 %v259, %v237
      %v262 = vadd.f32 %v261, %v244
      %vm263 = vcmask 785920
      %264 = vst.msk [vmem:[%s224] sm:$0xff] %vm263, %v262
      %265 = vset.pattern.permute.xlu0 3
      %266 = vperm.xlu0 %265, %v225
      %v267 = vpop.permute.xlu0 %266
      %v269 = vmul.f32 %v267, %v237
      %v270 = vadd.f32 %v269, %v244
      %vm271 = vcmask 1048320
      %272 = vst.msk [vmem:[%s224] sm:$0xff] %vm271, %v270
      %p273 = scmp.lt.s32.totalorder %s18, 1
      %s274 = scalar_select %p273, %s18, 1
      %p275 = scmp.lt.s32.totalorder %s19, 0
      %s276 = scalar_select %p275, %s19, 0
      %s277 = sadd.s32 %s276, %s274
      %s278 = smul.addr %s277, 8
      %s279 = scalar_lea.vmem %s3, %s278
      // Predicated region
      $region33: #{conti_feature_embedding.1} parent=31 // pred_check
        %p280 = pneg %p126
      $region34: #{conti_feature_embedding.1} parent=31 // pred_check_branch
        %282 = sbr.rel (%p280) target = $region36
      $region35: #{conti_feature_embedding.1} parent=31 // pred_region
        _
      $region36: #{conti_feature_embedding.1} parent=31 // pred_fallthru
        _
    $region32: #{conti_feature_embedding.1} parent=5 // pred_fallthru
      _
    %p283 = scmp.le.s32.totalorder 2, %s9
    // Predicated region
    $region37: #{conti_feature_embedding.1} parent=5 // pred_check
      %p284 = pneg %p283
    $region38: #{conti_feature_embedding.1} parent=5 // pred_check_branch
      %286 = sbr.rel (%p284) target = $region40
    $region39: #{conti_feature_embedding.1} parent=5 // pred_region
      %s287 = ssub.s32 %s9, 2
      // Predicated region
      $region41: #{conti_feature_embedding.1} parent=39 // pred_check
        %p288 = pneg %p132
      $region42: #{conti_feature_embedding.1} parent=39 // pred_check_branch
        %290 = sbr.rel (%p288) target = $region44
      $region43: #{conti_feature_embedding.1} parent=39 // pred_region
        %p291 = scmp.lt.s32.totalorder %s20, 1
        %s292 = scalar_select %p291, %s20, 1
        %p293 = scmp.lt.s32.totalorder %s21, 0
        %s294 = scalar_select %p293, %s21, 0
        %s295 = sadd.s32 %s294, %s292
        %s296 = smul.addr %s295, 8
        %s297 = scalar_lea.vmem %s3, %s296
      $region44: #{conti_feature_embedding.1} parent=39 // pred_fallthru
        _
    $region40: #{conti_feature_embedding.1} parent=5 // pred_fallthru
      _
  $region6: #{conti_feature_embedding.1} parent=0 // loop_footer
    %s13 = sadd.s32 1, %s9
  $region7: #{conti_feature_embedding.1} parent=0 // loop_footer_branch
    %8 = sbr.rel target = $region3
  $region8: #{conti_feature_embedding.1} parent=0 // loop_exit
    _

</llo_original>
